<compile_context>
chip_gen: v6e
topology: v6e:2x2x1
jax: 0.10.0
libtpu: 0.0.40
codegen_flags: <defaults>
</compile_context>

<pallas_src>
import functools

import jax
import jax.numpy as jnp
from jax import lax
from jax.experimental import pallas as pl
from jax.experimental.pallas import tpu as pltpu


def _round_up(a, b):
    return (a + b - 1) // b * b


def _decoder_mlp_kernel(x_ref, w1t_ref, b1_ref, w2t_ref, b2_ref, o_ref):
    """Fused per-row MLP, computed channels-first (lane-dense in M).

    x_ref:   (tm, L)       natural row-major tile of flattened positions
    w1t_ref: (d_f, L)      conv1 weight, (out_ch, in_ch) orientation
    b1_ref:  (d_f, 1)      conv1 bias
    w2t_ref: (out_p, d_f)  conv2 weight, (out_ch, in_ch), out channels padded to 8
    b2_ref:  (out_p, 1)    conv2 bias (zero-padded)
    o_ref:   (out_p, tm)   transposed (lane-dense) output tile
    """
    x = x_ref[...]                                               # (tm, L)

    # h^T = W1 @ X^T : contract both operands on their minor (L) axis — the
    # MXU-native "A @ B^T" form, so the big tile is never explicitly
    # transposed and the result is lane-dense in tm.
    h = lax.dot_general(
        w1t_ref[...], x,
        dimension_numbers=(((1,), (1,)), ((), ())),
        preferred_element_type=jnp.float32)                      # (d_f, tm)
    h = jnp.maximum(h + b1_ref[...], 0.0)                        # bias + ReLU

    # y^T = W2 @ h^T : standard (out_p, d_f) @ (d_f, tm); lane-dense in tm.
    y = jnp.dot(w2t_ref[...], h, preferred_element_type=jnp.float32)
    y = y + b2_ref[...]                                          # (out_p, tm)

    o_ref[...] = y.astype(o_ref.dtype)


def conv2d_decoder_forward(z, w1, b1, w2, b2, *, num_nodes, latent_dim,
                           output_dim, tm=2048):
    """Pallas implementation of Conv2d_Decoder.forward.

    z : (T, B, num_nodes * latent_dim) float32
    w1: (latent_dim, d_f)   (== PyTorch conv1.weight[:, :, 0, 0].T)
    b1: (d_f,)
    w2: (d_f, output_dim)   (== PyTorch conv2.weight[:, :, 0, 0].T)
    b2: (output_dim,)
    returns (T, B, num_nodes * output_dim)
    """
    T, B, F = z.shape
    L = latent_dim
    assert F == num_nodes * latent_dim, (F, num_nodes, latent_dim)
    d_f = w1.shape[1]
    M = T * B * num_nodes

    # Free reshape: (M, L) row-major is exactly z's memory layout.
    x = z.reshape(M, L)

    # Channel-major (PyTorch-orientation) weights; tiny, done once.
    w1_t = jnp.transpose(w1)                        # (d_f, L)
    w2_t = jnp.transpose(w2)                        # (output_dim, d_f)

    # Pad conv2 output channels to a sublane multiple (>= 8); padded rows have
    # zero weights/bias and are sliced off after the kernel.
    out_p = _round_up(max(output_dim, 8), 8)
    if out_p != output_dim:
        w2_t = jnp.pad(w2_t, ((0, out_p - output_dim), (0, 0)))
        b2 = jnp.pad(b2, (0, out_p - output_dim))
    b1_c = b1.reshape(d_f, 1)
    b2_c = b2.reshape(out_p, 1)

    # Row-tile size: multiple of 128 (lane-aligned output block), clamped so a
    # tiny problem is a single block.  A ragged last tile is clipped by Pallas
    # on both the read and the masked edge store; rows are independent so the
    # clipped region never contaminates valid output.
    tm_eff = max(128, (min(tm, _round_up(M, 128)) // 128) * 128)
    grid = (pl.cdiv(M, tm_eff),)

    flops = 2 * M * (L * d_f + d_f * out_p)
    bytes_accessed = 4 * (M * L + out_p * M + d_f * L + out_p * d_f + d_f + out_p)
    cost = pl.CostEstimate(flops=flops, transcendentals=0,
                           bytes_accessed=bytes_accessed)

    out_t = pl.pallas_call(
        _decoder_mlp_kernel,
        out_shape=jax.ShapeDtypeStruct((out_p, M), z.dtype),
        grid_spec=pltpu.PrefetchScalarGridSpec(
            num_scalar_prefetch=0,
            grid=grid,
            in_specs=[
                pl.BlockSpec((tm_eff, L), lambda i: (i, 0)),       # x tile
                pl.BlockSpec((d_f, L), lambda i: (0, 0)),          # W1 (resident)
                pl.BlockSpec((d_f, 1), lambda i: (0, 0)),          # b1
                pl.BlockSpec((out_p, d_f), lambda i: (0, 0)),      # W2 (resident)
                pl.BlockSpec((out_p, 1), lambda i: (0, 0)),        # b2
            ],
            out_specs=pl.BlockSpec((out_p, tm_eff), lambda i: (0, i)),
        ),
        compiler_params=pltpu.CompilerParams(
            dimension_semantics=("parallel",)),
        cost_estimate=cost,
    )(x, w1_t, b1_c, w2_t, b2_c)

    # (out_p, M) -> drop padded channels -> (M, out) -> (T, B, N*out).
    # The transpose touches only the small output tensor and fuses under jit.
    y = jnp.transpose(out_t[:output_dim, :])
    return y.reshape(T, B, num_nodes * output_dim)


def _reference(z, w1, b1, w2, b2, *, num_nodes, latent_dim, output_dim):
    """Plain-JAX reference mirroring the PyTorch forward exactly."""
    T, B, _ = z.shape
    zz = z.reshape(T, B, num_nodes, latent_dim)      # (T,B,N,L)
    zz = jnp.transpose(zz, (1, 3, 2, 0))             # (B,L,N,T)  == NCHW
    h = jnp.einsum("blnt,lf->bfnt", zz, w1) + b1[None, :, None, None]
    h = jnp.maximum(h, 0.0)
    y = jnp.einsum("bfnt,fo->bont", h, w2) + b2[None, :, None, None]
    y = jnp.transpose(y, (3, 0, 2, 1))               # (T,B,N,out)
    return y.reshape(T, B, num_nodes * output_dim)


if __name__ == "__main__":
    # Small, module-consistent shapes.
    latent_dim = 32
    output_dim = 4
    num_nodes = 8
    d_f = 64
    T, B = 8, 2

    key = jax.random.PRNGKey(0)
    kz, kw1, kb1, kw2, kb2 = jax.random.split(key, 5)

    z = jax.random.normal(kz, (T, B, num_nodes * latent_dim), dtype=jnp.float32)

    # PyTorch conv weights are (out, in, 1, 1); stored here pre-transposed as
    # (in, out) to match the wrapper interface.
    w1 = jax.random.normal(kw1, (latent_dim, d_f), dtype=jnp.float32) * 0.1
    b1 = jax.random.normal(kb1, (d_f,), dtype=jnp.float32) * 0.1
    w2 = jax.random.normal(kw2, (d_f, output_dim), dtype=jnp.float32) * 0.1
    b2 = jax.random.normal(kb2, (output_dim,), dtype=jnp.float32) * 0.1

    fwd = jax.jit(functools.partial(
        conv2d_decoder_forward,
        num_nodes=num_nodes, latent_dim=latent_dim, output_dim=output_dim))
    out = jax.block_until_ready(fwd(z, w1, b1, w2, b2))

    ref = _reference(
        z, w1, b1, w2, b2,
        num_nodes=num_nodes, latent_dim=latent_dim, output_dim=output_dim)

    assert out.shape == (T, B, num_nodes * output_dim), out.shape
    max_err = float(jnp.max(jnp.abs(out - ref)))
    assert jnp.allclose(out, ref, atol=1e-4, rtol=1e-4), f"mismatch {max_err}"

    print("KERNEL_OK")
</pallas_src>

<mosaic_0001>
module attributes {stable_mosaic.version = 11 : i64} {
  func.func @_decoder_mlp_kernel(%arg0: i32, %arg1: memref<128x32xf32, #tpu.memory_space<vmem>>, %arg2: memref<64x32xf32, #tpu.memory_space<vmem>>, %arg3: memref<64x1xf32, #tpu.memory_space<vmem>>, %arg4: memref<8x64xf32, #tpu.memory_space<vmem>>, %arg5: memref<8x1xf32, #tpu.memory_space<vmem>>, %arg6: memref<8x128xf32, #tpu.memory_space<vmem>>) attributes {dimension_semantics = [#tpu.dimension_semantics<parallel>], iteration_bounds = array<i64: 1>, scalar_prefetch = 0 : i64, scratch_operands = 0 : i64, tpu.core_type = #tpu.core_type<tc>, window_params = [{transform_indices = @transform_0, window_bounds = array<i64: 128, 32>}, {pipeline_mode = #tpu.pipeline_mode<synchronous>, transform_indices = @transform_1, window_bounds = array<i64: 64, 32>}, {pipeline_mode = #tpu.pipeline_mode<synchronous>, transform_indices = @transform_2, window_bounds = array<i64: 64, 1>}, {pipeline_mode = #tpu.pipeline_mode<synchronous>, transform_indices = @transform_3, window_bounds = array<i64: 8, 64>}, {pipeline_mode = #tpu.pipeline_mode<synchronous>, transform_indices = @transform_4, window_bounds = array<i64: 8, 1>}, {transform_indices = @transform_5, window_bounds = array<i64: 8, 128>}]} {
    %c0 = arith.constant 0 : index
    %c0_0 = arith.constant 0 : index
    %0 = vector.load %arg1[%c0, %c0_0] : memref<128x32xf32, #tpu.memory_space<vmem>>, vector<128x32xf32>
    %c0_1 = arith.constant 0 : index
    %c0_2 = arith.constant 0 : index
    %1 = vector.load %arg2[%c0_1, %c0_2] : memref<64x32xf32, #tpu.memory_space<vmem>>, vector<64x32xf32>
    %cst = arith.constant dense<0.000000e+00> : vector<64x128xf32>
    %2 = tpu.matmul %1, %0, %cst {dimension_numbers = #tpu.dot_dimension_numbers<[1], [1], [0], [0], [0, 0, 1, 0], [], []>} : vector<64x32xf32>, vector<128x32xf32>, vector<64x128xf32> -> vector<64x128xf32>
    %c0_3 = arith.constant 0 : index
    %c0_4 = arith.constant 0 : index
    %3 = vector.load %arg3[%c0_3, %c0_4] : memref<64x1xf32, #tpu.memory_space<vmem>>, vector<64x1xf32>
    %4 = vector.broadcast %3 : vector<64x1xf32> to vector<64x128xf32>
    %5 = arith.addf %2, %4 : vector<64x128xf32>
    %cst_5 = arith.constant 0.000000e+00 : f32
    %6 = vector.broadcast %cst_5 : f32 to vector<64x128xf32>
    %7 = arith.maximumf %5, %6 : vector<64x128xf32>
    %c0_6 = arith.constant 0 : index
    %c0_7 = arith.constant 0 : index
    %8 = vector.load %arg4[%c0_6, %c0_7] : memref<8x64xf32, #tpu.memory_space<vmem>>, vector<8x64xf32>
    %cst_8 = arith.constant dense<0.000000e+00> : vector<8x128xf32>
    %9 = tpu.matmul %8, %7, %cst_8 {dimension_numbers = #tpu.dot_dimension_numbers<[1], [0], [0], [1], [0, 0, 1, 1], [], []>} : vector<8x64xf32>, vector<64x128xf32>, vector<8x128xf32> -> vector<8x128xf32>
    %c0_9 = arith.constant 0 : index
    %c0_10 = arith.constant 0 : index
    %10 = vector.load %arg5[%c0_9, %c0_10] : memref<8x1xf32, #tpu.memory_space<vmem>>, vector<8x1xf32>
    %11 = vector.broadcast %10 : vector<8x1xf32> to vector<8x128xf32>
    %12 = arith.addf %9, %11 : vector<8x128xf32>
    %c0_11 = arith.constant 0 : index
    %c0_12 = arith.constant 0 : index
    %13 = vector.load %arg6[%c0_11, %c0_12] : memref<8x128xf32, #tpu.memory_space<vmem>>, vector<8x128xf32>
    tpu.vector_store %arg6[%c0_11, %c0_12], %12 {strides = array<i32>} : memref<8x128xf32, #tpu.memory_space<vmem>>, vector<8x128xf32>,
    return
  }
  func.func @transform_0(%arg0: i32) -> (i32, i32) {
    %c0_i32 = arith.constant 0 : i32
    %c0_i32_0 = arith.constant 0 : i32
    return %arg0, %c0_i32 : i32, i32
  }
  func.func @transform_1(%arg0: i32) -> (i32, i32) {
    %c0_i32 = arith.constant 0 : i32
    %c0_i32_0 = arith.constant 0 : i32
    %c0_i32_1 = arith.constant 0 : i32
    return %c0_i32, %c0_i32_0 : i32, i32
  }
  func.func @transform_2(%arg0: i32) -> (i32, i32) {
    %c0_i32 = arith.constant 0 : i32
    %c0_i32_0 = arith.constant 0 : i32
    %c0_i32_1 = arith.constant 0 : i32
    return %c0_i32, %c0_i32_0 : i32, i32
  }
  func.func @transform_3(%arg0: i32) -> (i32, i32) {
    %c0_i32 = arith.constant 0 : i32
    %c0_i32_0 = arith.constant 0 : i32
    %c0_i32_1 = arith.constant 0 : i32
    return %c0_i32, %c0_i32_0 : i32, i32
  }
  func.func @transform_4(%arg0: i32) -> (i32, i32) {
    %c0_i32 = arith.constant 0 : i32
    %c0_i32_0 = arith.constant 0 : i32
    %c0_i32_1 = arith.constant 0 : i32
    return %c0_i32, %c0_i32_0 : i32, i32
  }
  func.func @transform_5(%arg0: i32) -> (i32, i32) {
    %c0_i32 = arith.constant 0 : i32
    %c0_i32_0 = arith.constant 0 : i32
    return %c0_i32, %arg0 : i32, i32
  }
}

</mosaic_0001>

<llo_original>
// kernel: conv2d_decoder_forward.1
$region0: #{conv2d_decoder_forward.1}
  #allocation0 [shape = 'u32[]', space=smem, size = 0x4, offset = 0x4, fixed_abs, tag = 'smem constant byte address 0x4 - core index']
  #allocation1 [shape = 'u32[144,128]{1,0:T(1,128)}', space=vmem, size = 0x12000, scoped, tag = 'internal scratch']
  %s0 = inlined_call_operand.vmem [shape: f32[128,32], index: 0, kind: input, shape index: {}]
  %s1 = inlined_call_operand.vmem [shape: f32[64,32], index: 1, kind: input, shape index: {}]
  %s2 = inlined_call_operand.vmem [shape: f32[64,1], index: 2, kind: input, shape index: {}]
  %s3 = inlined_call_operand.vmem [shape: f32[8,64], index: 3, kind: input, shape index: {}]
  %s4 = inlined_call_operand.vmem [shape: f32[8,1], index: 4, kind: input, shape index: {}]
  %s5 = inlined_call_operand.vmem [shape: f32[8,128], index: 5, kind: output, shape index: {}]
  %s6 = sld [smem:[#allocation0]]
  $region30: #{conv2d_decoder_forward.1} parent=0
    _
  %s8 = ssub.s32 1, %s6
  %s9 = scalar_select 0, %s8, %s6
  // Predicated region
  $region2: #{conv2d_decoder_forward.1} parent=0 // pred_check
    _
  $region3: #{conv2d_decoder_forward.1} parent=0 // pred_check_branch
    %11 = sbr.rel (0) target = $region5
  $region4: #{conv2d_decoder_forward.1} parent=0 // pred_region
    _
  $region5: #{conv2d_decoder_forward.1} parent=0 // pred_fallthru
    _
  // Predicated region
  $region6: #{conv2d_decoder_forward.1} parent=0 // pred_check
    _
  $region7: #{conv2d_decoder_forward.1} parent=0 // pred_check_branch
    %13 = sbr.rel (0) target = $region9
  $region8: #{conv2d_decoder_forward.1} parent=0 // pred_region
    _
  $region9: #{conv2d_decoder_forward.1} parent=0 // pred_fallthru
    _
  // Predicated region
  $region10: #{conv2d_decoder_forward.1} parent=0 // pred_check
    _
  $region11: #{conv2d_decoder_forward.1} parent=0 // pred_check_branch
    %15 = sbr.rel (0) target = $region13
  $region12: #{conv2d_decoder_forward.1} parent=0 // pred_region
    _
  $region13: #{conv2d_decoder_forward.1} parent=0 // pred_fallthru
    _
  // Predicated region
  $region14: #{conv2d_decoder_forward.1} parent=0 // pred_check
    _
  $region15: #{conv2d_decoder_forward.1} parent=0 // pred_check_branch
    %17 = sbr.rel (0) target = $region17
  $region16: #{conv2d_decoder_forward.1} parent=0 // pred_region
    _
  $region17: #{conv2d_decoder_forward.1} parent=0 // pred_fallthru
    _
  // Predicated region
  $region18: #{conv2d_decoder_forward.1} parent=0 // pred_check
    _
  $region19: #{conv2d_decoder_forward.1} parent=0 // pred_check_branch
    %19 = sbr.rel (0) target = $region21
  $region20: #{conv2d_decoder_forward.1} parent=0 // pred_region
    _
  $region21: #{conv2d_decoder_forward.1} parent=0 // pred_fallthru
    _
  %v20 = vld [vmem:[%s0] sm:$0xff]
  %v21 = vld [vmem:[%s0 + $0x8] sm:$0xff]
  %v22 = vld [vmem:[%s0 + $0x10] sm:$0xff]
  %v23 = vld [vmem:[%s0 + $0x18] sm:$0xff]
  %v24 = vld [vmem:[%s0 + $0x20] sm:$0xff]
  %v25 = vld [vmem:[%s0 + $0x28] sm:$0xff]
  %v26 = vld [vmem:[%s0 + $0x30] sm:$0xff]
  %v27 = vld [vmem:[%s0 + $0x38] sm:$0xff]
  %v28 = vld [vmem:[%s0 + $0x40] sm:$0xff]
  %v29 = vld [vmem:[%s0 + $0x48] sm:$0xff]
  %v30 = vld [vmem:[%s0 + $0x50] sm:$0xff]
  %v31 = vld [vmem:[%s0 + $0x58] sm:$0xff]
  %v32 = vld [vmem:[%s0 + $0x60] sm:$0xff]
  %v33 = vld [vmem:[%s0 + $0x68] sm:$0xff]
  %v34 = vld [vmem:[%s0 + $0x70] sm:$0xff]
  %v35 = vld [vmem:[%s0 + $0x78] sm:$0xff]
  %v36 = vld [vmem:[%s1] sm:$0xff]
  %v37 = vld [vmem:[%s1 + $0x8] sm:$0xff]
  %v38 = vld [vmem:[%s1 + $0x10] sm:$0xff]
  %v39 = vld [vmem:[%s1 + $0x18] sm:$0xff]
  %v40 = vld [vmem:[%s1 + $0x20] sm:$0xff]
  %v41 = vld [vmem:[%s1 + $0x28] sm:$0xff]
  %v42 = vld [vmem:[%s1 + $0x30] sm:$0xff]
  %v43 = vld [vmem:[%s1 + $0x38] sm:$0xff]
  %v44 = vld [vmem:[%s2] sm:$0xff]
  %v45 = vld [vmem:[%s2 + $0x8] sm:$0xff]
  %v46 = vld [vmem:[%s2 + $0x10] sm:$0xff]
  %v47 = vld [vmem:[%s2 + $0x18] sm:$0xff]
  %v48 = vld [vmem:[%s2 + $0x20] sm:$0xff]
  %v49 = vld [vmem:[%s2 + $0x28] sm:$0xff]
  %v50 = vld [vmem:[%s2 + $0x30] sm:$0xff]
  %v51 = vld [vmem:[%s2 + $0x38] sm:$0xff]
  %53 = vset.pattern.permute.xlu0 0
  %54 = vperm.xlu0 %53, %v44
  %v55 = vpop.permute.xlu0 %54
  %58 = vset.pattern.permute.xlu0 0
  %59 = vperm.xlu0 %58, %v45
  %v60 = vpop.permute.xlu0 %59
  %63 = vset.pattern.permute.xlu0 0
  %64 = vperm.xlu0 %63, %v46
  %v65 = vpop.permute.xlu0 %64
  %68 = vset.pattern.permute.xlu0 0
  %69 = vperm.xlu0 %68, %v47
  %v70 = vpop.permute.xlu0 %69
  %73 = vset.pattern.permute.xlu0 0
  %74 = vperm.xlu0 %73, %v48
  %v75 = vpop.permute.xlu0 %74
  %78 = vset.pattern.permute.xlu0 0
  %79 = vperm.xlu0 %78, %v49
  %v80 = vpop.permute.xlu0 %79
  %83 = vset.pattern.permute.xlu0 0
  %84 = vperm.xlu0 %83, %v50
  %v85 = vpop.permute.xlu0 %84
  %88 = vset.pattern.permute.xlu0 0
  %89 = vperm.xlu0 %88, %v51
  %v90 = vpop.permute.xlu0 %89
  %vm92 = vcmask 261120
  %v94 = vsel %vm92, %v36, 0
  %v97 = vsel %vm92, %v37, 0
  %v100 = vsel %vm92, %v38, 0
  %v103 = vsel %vm92, %v39, 0
  %v106 = vsel %vm92, %v40, 0
  %v109 = vsel %vm92, %v41, 0
  %v112 = vsel %vm92, %v42, 0
  %v115 = vsel %vm92, %v43, 0
  %v118 = vsel %vm92, %v20, 0
  %v121 = vsel %vm92, %v21, 0
  %v124 = vsel %vm92, %v22, 0
  %v127 = vsel %vm92, %v23, 0
  %v130 = vsel %vm92, %v24, 0
  %v133 = vsel %vm92, %v25, 0
  %v136 = vsel %vm92, %v26, 0
  %v139 = vsel %vm92, %v27, 0
  %v142 = vsel %vm92, %v28, 0
  %v145 = vsel %vm92, %v29, 0
  %v148 = vsel %vm92, %v30, 0
  %v151 = vsel %vm92, %v31, 0
  %v154 = vsel %vm92, %v32, 0
  %v157 = vsel %vm92, %v33, 0
  %v160 = vsel %vm92, %v34, 0
  %v163 = vsel %vm92, %v35, 0
  %165 = vmatprep.subr.mxu0 0.0
  %166 = vmatpush1.xpose.msra.mxu0 %v163
  %167 = vmatprep.subr.mxu0 0.0
  %168 = vmatpush1.xpose.msra.mxu0 %v160
  %169 = vmatprep.subr.mxu0 0.0
  %170 = vmatpush1.xpose.msra.mxu0 %v157
  %171 = vmatprep.subr.mxu0 0.0
  %172 = vmatpush1.xpose.msra.mxu0 %v154
  %173 = vmatprep.subr.mxu0 0.0
  %174 = vmatpush1.xpose.msra.mxu0 %v151
  %175 = vmatprep.subr.mxu0 0.0
  %176 = vmatpush1.xpose.msra.mxu0 %v148
  %177 = vmatprep.subr.mxu0 0.0
  %178 = vmatpush1.xpose.msra.mxu0 %v145
  %179 = vmatprep.subr.mxu0 0.0
  %180 = vmatpush1.xpose.msra.mxu0 %v142
  %181 = vmatprep.subr.mxu0 0.0
  %182 = vmatpush1.xpose.msra.mxu0 %v139
  %183 = vmatprep.subr.mxu0 0.0
  %184 = vmatpush1.xpose.msra.mxu0 %v136
  %185 = vmatprep.subr.mxu0 0.0
  %186 = vmatpush1.xpose.msra.mxu0 %v133
  %187 = vmatprep.subr.mxu0 0.0
  %188 = vmatpush1.xpose.msra.mxu0 %v130
  %189 = vmatprep.subr.mxu0 0.0
  %190 = vmatpush1.xpose.msra.mxu0 %v127
  %191 = vmatprep.subr.mxu0 0.0
  %192 = vmatpush1.xpose.msra.mxu0 %v124
  %193 = vmatprep.subr.mxu0 0.0
  %194 = vmatpush1.xpose.msra.mxu0 %v121
  %195 = vmatprep.subr.mxu0 0.0
  %196 = vmatpush1.xpose.msra.mxu0 %v118
  %197 = vmatprep.subr.mxu0 0.0
  %198 = vmatpush2.xpose.msra.mxu0 0.0
  %199 = vmatprep.subr.mxu0 0.0
  %200 = vmatpush2.xpose.msra.mxu0 0.0
  %201 = vmatprep.subr.mxu0 0.0
  %202 = vmatpush2.xpose.msra.mxu0 0.0
  %203 = vmatprep.subr.mxu0 0.0
  %204 = vmatpush2.xpose.msra.mxu0 0.0
  %205 = vmatprep.subr.mxu0 0.0
  %206 = vmatpush2.xpose.msra.mxu0 0.0
  %207 = vmatprep.subr.mxu0 0.0
  %208 = vmatpush2.xpose.msra.mxu0 0.0
  %209 = vmatprep.subr.mxu0 0.0
  %210 = vmatpush2.xpose.msra.mxu0 0.0
  %211 = vmatprep.subr.mxu0 0.0
  %212 = vmatpush2.xpose.msra.mxu0 0.0
  %213 = vmatprep.subr.mxu0 0.0
  %214 = vmatpush2.xpose.msra.mxu0 0.0
  %215 = vmatprep.subr.mxu0 0.0
  %216 = vmatpush2.xpose.msra.mxu0 0.0
  %217 = vmatprep.subr.mxu0 0.0
  %218 = vmatpush2.xpose.msra.mxu0 0.0
  %219 = vmatprep.subr.mxu0 0.0
  %220 = vmatpush2.xpose.msra.mxu0 0.0
  %221 = vmatprep.subr.mxu0 0.0
  %222 = vmatpush2.xpose.msra.mxu0 0.0
  %223 = vmatprep.subr.mxu0 0.0
  %224 = vmatpush2.xpose.msra.mxu0 0.0
  %225 = vmatprep.subr.mxu0 0.0
  %226 = vmatpush2.xpose.msra.mxu0 0.0
  %227 = vmatprep.subr.mxu0 0.0
  %228 = vmatpush2.xpose.msra.mxu0 0.0
  %229 = vmatprep.mubr.f32.mxu0 0.0
  %230 = vmatmul.mubr.f32.gmra.mxu0 %v94
  %v231 = vpop.f32.mrf.mxu0
  %v232 = vadd.f32 %v55, %v231
  %v233 = vpop.f32.mrf.mxu0
  %234 = vmatprep.mubr.f32.mxu0 0.0
  %235 = vmatmul.mubr.f32.gmra.mxu0 %v97
  %v236 = vpop.f32.mrf.mxu0
  %v237 = vadd.f32 %v60, %v236
  %v238 = vpop.f32.mrf.mxu0
  %239 = vmatprep.mubr.f32.mxu0 0.0
  %240 = vmatmul.mubr.f32.gmra.mxu0 %v100
  %v241 = vpop.f32.mrf.mxu0
  %v242 = vadd.f32 %v65, %v241
  %v243 = vpop.f32.mrf.mxu0
  %244 = vmatprep.mubr.f32.mxu0 0.0
  %245 = vmatmul.mubr.f32.gmra.mxu0 %v103
  %v246 = vpop.f32.mrf.mxu0
  %v247 = vadd.f32 %v70, %v246
  %v248 = vpop.f32.mrf.mxu0
  %249 = vmatprep.mubr.f32.mxu0 0.0
  %250 = vmatmul.mubr.f32.gmra.mxu0 %v106
  %v251 = vpop.f32.mrf.mxu0
  %v252 = vadd.f32 %v75, %v251
  %v253 = vpop.f32.mrf.mxu0
  %254 = vmatprep.mubr.f32.mxu0 0.0
  %255 = vmatmul.mubr.f32.gmra.mxu0 %v109
  %v256 = vpop.f32.mrf.mxu0
  %v257 = vadd.f32 %v80, %v256
  %v258 = vpop.f32.mrf.mxu0
  %259 = vmatprep.mubr.f32.mxu0 0.0
  %260 = vmatmul.mubr.f32.gmra.mxu0 %v112
  %v261 = vpop.f32.mrf.mxu0
  %v262 = vadd.f32 %v85, %v261
  %v263 = vpop.f32.mrf.mxu0
  %264 = vmatprep.mubr.f32.mxu0 0.0
  %265 = vmatmul.mubr.f32.gmra.mxu0 %v115
  %v266 = vpop.f32.mrf.mxu0
  %v267 = vadd.f32 %v90, %v266
  %v268 = vpop.f32.mrf.mxu0
  %269 = vdwg.mxu0
  %v270 = vmax.f32 %v232, 0.0
  %v271 = vmax.f32 %v237, 0.0
  %v272 = vmax.f32 %v242, 0.0
  %v273 = vmax.f32 %v247, 0.0
  %v274 = vmax.f32 %v252, 0.0
  %v275 = vmax.f32 %v257, 0.0
  %v276 = vmax.f32 %v262, 0.0
  %v277 = vmax.f32 %v267, 0.0
  %v278 = vld [vmem:[%s3] sm:$0xff]
  %v279 = vld [vmem:[%s4] sm:$0xff]
  %281 = vset.pattern.permute.xlu0 0
  %282 = vperm.xlu0 %281, %v279
  %v283 = vpop.permute.xlu0 %282
  %vm285 = vcmask 523264
  %v287 = vsel %vm285, %v278, 0
  %289 = vmatprep.subr.mxu0 0.0
  %290 = vmatpush1.msra.mxu0 0.0
  %291 = vmatprep.subr.mxu0 0.0
  %292 = vmatpush1.msra.mxu0 0.0
  %293 = vmatprep.subr.mxu0 0.0
  %294 = vmatpush1.msra.mxu0 0.0
  %295 = vmatprep.subr.mxu0 0.0
  %296 = vmatpush1.msra.mxu0 0.0
  %297 = vmatprep.subr.mxu0 0.0
  %298 = vmatpush1.msra.mxu0 0.0
  %299 = vmatprep.subr.mxu0 0.0
  %300 = vmatpush1.msra.mxu0 0.0
  %301 = vmatprep.subr.mxu0 0.0
  %302 = vmatpush1.msra.mxu0 0.0
  %303 = vmatprep.subr.mxu0 0.0
  %304 = vmatpush1.msra.mxu0 0.0
  %305 = vmatprep.subr.mxu0 0.0
  %306 = vmatpush1.msra.mxu0 %v277
  %307 = vmatprep.subr.mxu0 0.0
  %308 = vmatpush1.msra.mxu0 %v276
  %309 = vmatprep.subr.mxu0 0.0
  %310 = vmatpush1.msra.mxu0 %v275
  %311 = vmatprep.subr.mxu0 0.0
  %312 = vmatpush1.msra.mxu0 %v274
  %313 = vmatprep.subr.mxu0 0.0
  %314 = vmatpush1.msra.mxu0 %v273
  %315 = vmatprep.subr.mxu0 0.0
  %316 = vmatpush1.msra.mxu0 %v272
  %317 = vmatprep.subr.mxu0 0.0
  %318 = vmatpush1.msra.mxu0 %v271
  %319 = vmatprep.subr.mxu0 0.0
  %320 = vmatpush1.msra.mxu0 %v270
  %321 = vmatprep.subr.mxu0 0.0
  %322 = vmatpush2.msra.mxu0 0.0
  %323 = vmatprep.subr.mxu0 0.0
  %324 = vmatpush2.msra.mxu0 0.0
  %325 = vmatprep.subr.mxu0 0.0
  %326 = vmatpush2.msra.mxu0 0.0
  %327 = vmatprep.subr.mxu0 0.0
  %328 = vmatpush2.msra.mxu0 0.0
  %329 = vmatprep.subr.mxu0 0.0
  %330 = vmatpush2.msra.mxu0 0.0
  %331 = vmatprep.subr.mxu0 0.0
  %332 = vmatpush2.msra.mxu0 0.0
  %333 = vmatprep.subr.mxu0 0.0
  %334 = vmatpush2.msra.mxu0 0.0
  %335 = vmatprep.subr.mxu0 0.0
  %336 = vmatpush2.msra.mxu0 0.0
  %337 = vmatprep.subr.mxu0 0.0
  %338 = vmatpush2.msra.mxu0 0.0
  %339 = vmatprep.subr.mxu0 0.0
  %340 = vmatpush2.msra.mxu0 0.0
  %341 = vmatprep.subr.mxu0 0.0
  %342 = vmatpush2.msra.mxu0 0.0
  %343 = vmatprep.subr.mxu0 0.0
  %344 = vmatpush2.msra.mxu0 0.0
  %345 = vmatprep.subr.mxu0 0.0
  %346 = vmatpush2.msra.mxu0 0.0
  %347 = vmatprep.subr.mxu0 0.0
  %348 = vmatpush2.msra.mxu0 0.0
  %349 = vmatprep.subr.mxu0 0.0
  %350 = vmatpush2.msra.mxu0 0.0
  %351 = vmatprep.subr.mxu0 0.0
  %352 = vmatpush2.msra.mxu0 0.0
  %353 = vmatprep.mubr.f32.mxu0 0.0
  %354 = vmatmul.mubr.f32.gmra.mxu0 %v287
  %v355 = vpop.f32.mrf.mxu0
  %v356 = vadd.f32 %v283, %v355
  %v357 = vpop.f32.mrf.mxu0
  %358 = vdwg.mxu0
  %359 = vst [vmem:[%s5] sm:$0xff] %v356
  // Predicated region
  $region22: #{conv2d_decoder_forward.1} parent=0 // pred_check
    _
  $region23: #{conv2d_decoder_forward.1} parent=0 // pred_check_branch
    %361 = sbr.rel (0) target = $region25
  $region24: #{conv2d_decoder_forward.1} parent=0 // pred_region
    _
  $region25: #{conv2d_decoder_forward.1} parent=0 // pred_fallthru
    _
  // Predicated region
  $region26: #{conv2d_decoder_forward.1} parent=0 // pred_check
    _
  $region27: #{conv2d_decoder_forward.1} parent=0 // pred_check_branch
    %363 = sbr.rel (0) target = $region29
  $region28: #{conv2d_decoder_forward.1} parent=0 // pred_region
    _
  $region29: #{conv2d_decoder_forward.1} parent=0 // pred_fallthru
    _

</llo_original>
